<compile_context>
chip_gen: v7x
topology: tpu7x:2x2x1
jax: 0.10.0
libtpu: 0.0.40
codegen_flags: <defaults>
</compile_context>

<pallas_src>
import jax
import jax.numpy as jnp
from jax.experimental import pallas as pl
from jax.experimental.pallas import tpu as pltpu

# Model dims (mirrors the PyTorch module's __init__)
INPUT_SIZE = 16
HIDDEN_SIZE1 = 32
HIDDEN_SIZE2 = 16
OUTPUT_SIZE = 4

F_PAD = 128    # lane-dense padded feature width for every layer (128-lane vreg / MXU)
TILE_B = 128   # batch tile (sublane aligned; amortizes ~0.35us per-step overhead)


def _mlp_kernel(x_ref, w_ref, b_ref, o_ref):
    """Fused fc1->ReLU->(dropout=id)->fc2->ReLU->(dropout=id)->fc3.

    x_ref : (TILE_B, F_PAD) bf16   zero-padded activations
    w_ref : (3, F_PAD, F_PAD) bf16 zero-padded weight slab, (in, out) layout
    b_ref : (3, F_PAD) f32         zero-padded bias slab
    o_ref : (TILE_B, F_PAD) f32    padded output (cols >= OUTPUT_SIZE are zero)
    """
    b = b_ref[...]                                            # (3, F_PAD) f32

    # fc1 + ReLU (dropout1 is identity at inference)
    h1 = jnp.dot(x_ref[...], w_ref[0], preferred_element_type=jnp.float32)
    h1 = jnp.maximum(h1 + b[0:1, :], 0.0)

    # fc2 + ReLU (dropout2 is identity at inference)
    h2 = jnp.dot(h1.astype(jnp.bfloat16), w_ref[1],
                 preferred_element_type=jnp.float32)
    h2 = jnp.maximum(h2 + b[1:2, :], 0.0)

    # fc3
    out = jnp.dot(h2.astype(jnp.bfloat16), w_ref[2],
                  preferred_element_type=jnp.float32)
    o_ref[...] = (out + b[2:3, :]).astype(o_ref.dtype)


@jax.jit
def mlp_forward(x, w_slab, b_slab):
    """x: (B, INPUT_SIZE) f32. Returns (B, OUTPUT_SIZE) f32."""
    B = x.shape[0]
    B_pad = pl.cdiv(B, TILE_B) * TILE_B

    # Zero-pad: features -> F_PAD lanes, batch -> multiple of TILE_B; bf16 for MXU.
    x_p = jnp.zeros((B_pad, F_PAD), jnp.bfloat16)
    x_p = x_p.at[:B, :INPUT_SIZE].set(x.astype(jnp.bfloat16))

    out_p = pl.pallas_call(
        _mlp_kernel,
        out_shape=jax.ShapeDtypeStruct((B_pad, F_PAD), jnp.float32),
        grid_spec=pltpu.PrefetchScalarGridSpec(
            num_scalar_prefetch=0,
            grid=(B_pad // TILE_B,),
            in_specs=[
                pl.BlockSpec((TILE_B, F_PAD), lambda i: (i, 0)),        # x tile
                pl.BlockSpec((3, F_PAD, F_PAD), lambda i: (0, 0, 0)),   # weights resident
                pl.BlockSpec((3, F_PAD), lambda i: (0, 0)),             # biases resident
            ],
            out_specs=pl.BlockSpec((TILE_B, F_PAD), lambda i: (i, 0)),
        ),
        compiler_params=pltpu.CompilerParams(
            dimension_semantics=("parallel",)),   # shards batch across v7x's 2 TCs
    )(x_p, w_slab, b_slab)

    return out_p[:B, :OUTPUT_SIZE]


def init_params(key):
    """Deterministic init mimicking PyTorch nn.Linear default
    (uniform(-1/sqrt(fan_in), 1/sqrt(fan_in))). Weights stored as (in, out)."""
    keys = jax.random.split(key, 6)

    def linear(kw, kb, fan_in, fan_out):
        bound = 1.0 / float(jnp.sqrt(jnp.float32(fan_in)))
        w = jax.random.uniform(kw, (fan_in, fan_out), jnp.float32, -bound, bound)
        b = jax.random.uniform(kb, (fan_out,), jnp.float32, -bound, bound)
        return w, b

    l1 = linear(keys[0], keys[1], INPUT_SIZE, HIDDEN_SIZE1)
    l2 = linear(keys[2], keys[3], HIDDEN_SIZE1, HIDDEN_SIZE2)
    l3 = linear(keys[4], keys[5], HIDDEN_SIZE2, OUTPUT_SIZE)
    return (l1, l2, l3)


def pack_params(layers):
    """Pack the three (in,out) weights / (out,) biases into zero-padded slabs.
    Pad entries are zero so padded lanes never leak between layers."""
    w_slab = jnp.zeros((3, F_PAD, F_PAD), jnp.float32)
    b_slab = jnp.zeros((3, F_PAD), jnp.float32)
    for i, (w, b) in enumerate(layers):
        fi, fo = w.shape
        w_slab = w_slab.at[i, :fi, :fo].set(w)
        b_slab = b_slab.at[i, :fo].set(b)
    return w_slab.astype(jnp.bfloat16), b_slab


def reference_forward(x, layers):
    h = x
    for idx, (w, b) in enumerate(layers):
        h = h @ w + b
        if idx < 2:
            h = jnp.maximum(h, 0.0)   # dropout = identity at inference
    return h


if __name__ == "__main__":
    BATCH = 8
    key = jax.random.PRNGKey(0)
    k_x, k_p = jax.random.split(key)
    x = jax.random.normal(k_x, (BATCH, INPUT_SIZE), jnp.float32)

    layers = init_params(k_p)
    w_slab, b_slab = pack_params(layers)

    out = mlp_forward(x, w_slab, b_slab)
    out = jax.block_until_ready(out)

    ref = reference_forward(x, layers)
    assert out.shape == (BATCH, OUTPUT_SIZE)
    # bf16 inputs on the MXU (f32 accumulation) -> compare with bf16-level tolerance.
    assert jnp.allclose(out, ref, atol=5e-2, rtol=5e-2), (
        f"max abs err = {float(jnp.max(jnp.abs(out - ref)))}"
    )

    print("KERNEL_OK")
</pallas_src>

<mosaic_0001>
module attributes {stable_mosaic.version = 11 : i64} {
  func.func @_mlp_kernel(%arg0: i32, %arg1: memref<128x128xbf16, #tpu.memory_space<vmem>>, %arg2: memref<3x128x128xbf16, #tpu.memory_space<vmem>>, %arg3: memref<3x128xf32, #tpu.memory_space<vmem>>, %arg4: memref<128x128xf32, #tpu.memory_space<vmem>>) attributes {dimension_semantics = [#tpu.dimension_semantics<parallel>], iteration_bounds = array<i64: 1>, scalar_prefetch = 0 : i64, scratch_operands = 0 : i64, tpu.core_type = #tpu.core_type<tc>, window_params = [{transform_indices = @transform_0, window_bounds = array<i64: 128, 128>}, {pipeline_mode = #tpu.pipeline_mode<synchronous>, transform_indices = @transform_1, window_bounds = array<i64: 3, 128, 128>}, {pipeline_mode = #tpu.pipeline_mode<synchronous>, transform_indices = @transform_2, window_bounds = array<i64: 3, 128>}, {transform_indices = @transform_3, window_bounds = array<i64: 128, 128>}]} {
    %c0 = arith.constant 0 : index
    %c0_0 = arith.constant 0 : index
    %0 = vector.load %arg3[%c0, %c0_0] : memref<3x128xf32, #tpu.memory_space<vmem>>, vector<3x128xf32>
    %c0_1 = arith.constant 0 : index
    %c0_2 = arith.constant 0 : index
    %1 = vector.load %arg1[%c0_1, %c0_2] : memref<128x128xbf16, #tpu.memory_space<vmem>>, vector<128x128xbf16>
    %c0_3 = arith.constant 0 : index
    %c0_4 = arith.constant 0 : index
    %c0_5 = arith.constant 0 : index
    %2 = vector.load %arg2[%c0_3, %c0_4, %c0_5] : memref<3x128x128xbf16, #tpu.memory_space<vmem>>, vector<1x128x128xbf16>
    %3 = vector.shape_cast %2 : vector<1x128x128xbf16> to vector<128x128xbf16>
    %cst = arith.constant dense<0.000000e+00> : vector<128x128xf32>
    %4 = tpu.matmul %1, %3, %cst {dimension_numbers = #tpu.dot_dimension_numbers<[1], [0], [0], [1], [0, 0, 1, 1], [], []>} : vector<128x128xbf16>, vector<128x128xbf16>, vector<128x128xf32> -> vector<128x128xf32>
    %5 = vector.extract_strided_slice %0 {offsets = [0, 0], sizes = [1, 128], strides = [1, 1]} : vector<3x128xf32> to vector<1x128xf32>
    %6 = vector.broadcast %5 : vector<1x128xf32> to vector<128x128xf32>
    %7 = arith.addf %4, %6 : vector<128x128xf32>
    %cst_6 = arith.constant 0.000000e+00 : f32
    %8 = vector.broadcast %cst_6 : f32 to vector<128x128xf32>
    %9 = arith.maximumf %7, %8 : vector<128x128xf32>
    %10 = arith.truncf %9 : vector<128x128xf32> to vector<128x128xbf16>
    %c1 = arith.constant 1 : index
    %c0_7 = arith.constant 0 : index
    %c0_8 = arith.constant 0 : index
    %11 = vector.load %arg2[%c1, %c0_7, %c0_8] : memref<3x128x128xbf16, #tpu.memory_space<vmem>>, vector<1x128x128xbf16>
    %12 = vector.shape_cast %11 : vector<1x128x128xbf16> to vector<128x128xbf16>
    %cst_9 = arith.constant dense<0.000000e+00> : vector<128x128xf32>
    %13 = tpu.matmul %10, %12, %cst_9 {dimension_numbers = #tpu.dot_dimension_numbers<[1], [0], [0], [1], [0, 0, 1, 1], [], []>} : vector<128x128xbf16>, vector<128x128xbf16>, vector<128x128xf32> -> vector<128x128xf32>
    %14 = vector.extract_strided_slice %0 {offsets = [1, 0], sizes = [1, 128], strides = [1, 1]} : vector<3x128xf32> to vector<1x128xf32>
    %15 = vector.broadcast %14 : vector<1x128xf32> to vector<128x128xf32>
    %16 = arith.addf %13, %15 : vector<128x128xf32>
    %cst_10 = arith.constant 0.000000e+00 : f32
    %17 = vector.broadcast %cst_10 : f32 to vector<128x128xf32>
    %18 = arith.maximumf %16, %17 : vector<128x128xf32>
    %19 = arith.truncf %18 : vector<128x128xf32> to vector<128x128xbf16>
    %c2 = arith.constant 2 : index
    %c0_11 = arith.constant 0 : index
    %c0_12 = arith.constant 0 : index
    %20 = vector.load %arg2[%c2, %c0_11, %c0_12] : memref<3x128x128xbf16, #tpu.memory_space<vmem>>, vector<1x128x128xbf16>
    %21 = vector.shape_cast %20 : vector<1x128x128xbf16> to vector<128x128xbf16>
    %cst_13 = arith.constant dense<0.000000e+00> : vector<128x128xf32>
    %22 = tpu.matmul %19, %21, %cst_13 {dimension_numbers = #tpu.dot_dimension_numbers<[1], [0], [0], [1], [0, 0, 1, 1], [], []>} : vector<128x128xbf16>, vector<128x128xbf16>, vector<128x128xf32> -> vector<128x128xf32>
    %23 = vector.extract_strided_slice %0 {offsets = [2, 0], sizes = [1, 128], strides = [1, 1]} : vector<3x128xf32> to vector<1x128xf32>
    %24 = vector.broadcast %23 : vector<1x128xf32> to vector<128x128xf32>
    %25 = arith.addf %22, %24 : vector<128x128xf32>
    %c0_14 = arith.constant 0 : index
    %c0_15 = arith.constant 0 : index
    %26 = vector.load %arg4[%c0_14, %c0_15] : memref<128x128xf32, #tpu.memory_space<vmem>>, vector<128x128xf32>
    tpu.vector_store %arg4[%c0_14, %c0_15], %25 {strides = array<i32>} : memref<128x128xf32, #tpu.memory_space<vmem>>, vector<128x128xf32>,
    return
  }
  func.func @transform_0(%arg0: i32) -> (i32, i32) {
    %c0_i32 = arith.constant 0 : i32
    %c0_i32_0 = arith.constant 0 : i32
    return %arg0, %c0_i32 : i32, i32
  }
  func.func @transform_1(%arg0: i32) -> (i32, i32, i32) {
    %c0_i32 = arith.constant 0 : i32
    %c0_i32_0 = arith.constant 0 : i32
    %c0_i32_1 = arith.constant 0 : i32
    %c0_i32_2 = arith.constant 0 : i32
    return %c0_i32, %c0_i32_0, %c0_i32_1 : i32, i32, i32
  }
  func.func @transform_2(%arg0: i32) -> (i32, i32) {
    %c0_i32 = arith.constant 0 : i32
    %c0_i32_0 = arith.constant 0 : i32
    %c0_i32_1 = arith.constant 0 : i32
    return %c0_i32, %c0_i32_0 : i32, i32
  }
  func.func @transform_3(%arg0: i32) -> (i32, i32) {
    %c0_i32 = arith.constant 0 : i32
    %c0_i32_0 = arith.constant 0 : i32
    return %arg0, %c0_i32 : i32, i32
  }
}

</mosaic_0001>

<llo_original>
// kernel: mlp_forward.1
$region0: #{mlp_forward.1}
  #allocation0 [shape = 'u32[]', space=smem, size = 0x4, offset = 0x4, fixed_abs, tag = 'smem constant byte address 0x4 - core index']
  #allocation1 [shape = 'u32[144,128]{1,0:T(1,128)}', space=vmem, size = 0x12000, scoped, tag = 'internal scratch']
  %s0 = inlined_call_operand.vmem [shape: bf16[128,128], index: 0, kind: input, shape index: {}]
  %s1 = inlined_call_operand.hbm [shape: bf16[3,128,128], index: 1, kind: input, shape index: {}]
  %s2 = inlined_call_operand.vmem [shape: f32[3,128], index: 2, kind: input, shape index: {}]
  %s3 = inlined_call_operand.vmem [shape: f32[128,128], index: 3, kind: output, shape index: {}]
  %s4 = sld [smem:[#allocation0]]
  $region26: #{mlp_forward.1} parent=0
    _
  %s6 = ssub.s32 1, %s4
  %s7 = scalar_select 0, %s6, %s4
  $region1: #{mlp_forward.1} parent=0
    #allocation2 [shape = 'u8[98304]{0}', space=vmem, size = 0x18000, scoped, tag = 'input window, operand 1, single buffered']
    #allocation3 [shape = 's32[1]{0}', space=sflag, size = 0x4, scoped, tag = 'scoped memory for mlp_forward.1']
    %8 = vsyncpa [#allocation3], 0
    // Predicated region
    $region2: #{mlp_forward.1} parent=1 // pred_check
      _
    $region3: #{mlp_forward.1} parent=1 // pred_check_branch
      %10 = sbr.rel (0) target = $region5
    $region4: #{mlp_forward.1} parent=1 // pred_region
      _
    $region5: #{mlp_forward.1} parent=1 // pred_fallthru
      _
    // Predicated region
    $region6: #{mlp_forward.1} parent=1 // pred_check
      _
    $region7: #{mlp_forward.1} parent=1 // pred_check_branch
      %12 = sbr.rel (0) target = $region9
    $region8: #{mlp_forward.1} parent=1 // pred_region
      %s14 = ssub.s32 3072, 3072
      %15 = vsyncadd [#allocation3], %s14
      %s16 = sshll.u32 [#allocation2], 4
      %s17 = int_to_ptr.vmem [resolvable:$true] %s16
      %22 = dma.hbm_to_vmem [thread:$0]  %s1, 3072, %s17, [#allocation3], 64, 64, 4
    $region9: #{mlp_forward.1} parent=1 // pred_fallthru
      _
    // Predicated region
    $region10: #{mlp_forward.1} parent=1 // pred_check
      _
    $region11: #{mlp_forward.1} parent=1 // pred_check_branch
      %24 = sbr.rel (0) target = $region13
    $region12: #{mlp_forward.1} parent=1 // pred_region
      _
    $region13: #{mlp_forward.1} parent=1 // pred_fallthru
      _
    // Predicated region
    $region14: #{mlp_forward.1} parent=1 // pred_check
      _
    $region15: #{mlp_forward.1} parent=1 // pred_check_branch
      %26 = sbr.rel (0) target = $region17
    $region16: #{mlp_forward.1} parent=1 // pred_region
      %27 = dma.done [#allocation3], 3072
    $region17: #{mlp_forward.1} parent=1 // pred_fallthru
      _
    %v29 = vld [vmem:[%s2] sm:$0x7]
    %v30 = vld [vmem:[%s0] sm:$0xf]
    %v31 = vld [vmem:[%s0 + $0x4] sm:$0xf]
    %v32 = vld [vmem:[%s0 + $0x8] sm:$0xf]
    %v33 = vld [vmem:[%s0 + $0xc] sm:$0xf]
    %v34 = vld [vmem:[%s0 + $0x10] sm:$0xf]
    %v35 = vld [vmem:[%s0 + $0x14] sm:$0xf]
    %v36 = vld [vmem:[%s0 + $0x18] sm:$0xf]
    %v37 = vld [vmem:[%s0 + $0x1c] sm:$0xf]
    %v38 = vld [vmem:[%s0 + $0x20] sm:$0xf]
    %v39 = vld [vmem:[%s0 + $0x24] sm:$0xf]
    %v40 = vld [vmem:[%s0 + $0x28] sm:$0xf]
    %v41 = vld [vmem:[%s0 + $0x2c] sm:$0xf]
    %v42 = vld [vmem:[%s0 + $0x30] sm:$0xf]
    %v43 = vld [vmem:[%s0 + $0x34] sm:$0xf]
    %v44 = vld [vmem:[%s0 + $0x38] sm:$0xf]
    %v45 = vld [vmem:[%s0 + $0x3c] sm:$0xf]
    %v46 = vld [vmem:[#allocation2] sm:$0xf]
    %v47 = vld [vmem:[#allocation2 + $0x4] sm:$0xf]
    %v48 = vld [vmem:[#allocation2 + $0x8] sm:$0xf]
    %v49 = vld [vmem:[#allocation2 + $0xc] sm:$0xf]
    %v50 = vld [vmem:[#allocation2 + $0x10] sm:$0xf]
    %v51 = vld [vmem:[#allocation2 + $0x14] sm:$0xf]
    %v52 = vld [vmem:[#allocation2 + $0x18] sm:$0xf]
    %v53 = vld [vmem:[#allocation2 + $0x1c] sm:$0xf]
    %v54 = vld [vmem:[#allocation2 + $0x20] sm:$0xf]
    %v55 = vld [vmem:[#allocation2 + $0x24] sm:$0xf]
    %v56 = vld [vmem:[#allocation2 + $0x28] sm:$0xf]
    %v57 = vld [vmem:[#allocation2 + $0x2c] sm:$0xf]
    %v58 = vld [vmem:[#allocation2 + $0x30] sm:$0xf]
    %v59 = vld [vmem:[#allocation2 + $0x34] sm:$0xf]
    %v60 = vld [vmem:[#allocation2 + $0x38] sm:$0xf]
    %v61 = vld [vmem:[#allocation2 + $0x3c] sm:$0xf]
    %v62 = vlaneseq
    %v63 = vshrl.u32 %v62, 7
    %v64 = vsub.s32 0, %v63
    %v65 = vrot.slane %v29, %v64
    %v82 = vunpack.c.l.b16 %v30
    %v83 = vunpack.c.l.b16 %v31
    %v84 = vunpack.c.l.b16 %v32
    %v85 = vunpack.c.l.b16 %v33
    %v86 = vunpack.c.l.b16 %v34
    %v87 = vunpack.c.l.b16 %v35
    %v88 = vunpack.c.l.b16 %v36
    %v89 = vunpack.c.l.b16 %v37
    %v90 = vunpack.c.l.b16 %v38
    %v91 = vunpack.c.l.b16 %v39
    %v92 = vunpack.c.l.b16 %v40
    %v93 = vunpack.c.l.b16 %v41
    %v94 = vunpack.c.l.b16 %v42
    %v95 = vunpack.c.l.b16 %v43
    %v96 = vunpack.c.l.b16 %v44
    %v97 = vunpack.c.l.b16 %v45
    %v98 = vpack.c.b16 %v83, %v82
    %v99 = vpack.c.b16 %v85, %v84
    %v100 = vpack.c.b16 %v87, %v86
    %v101 = vpack.c.b16 %v89, %v88
    %v102 = vpack.c.b16 %v91, %v90
    %v103 = vpack.c.b16 %v93, %v92
    %v104 = vpack.c.b16 %v95, %v94
    %v105 = vpack.c.b16 %v97, %v96
    %v130 = vunpack.c.l.b16 %v46
    %v131 = vunpack.c.l.b16 %v47
    %v132 = vunpack.c.l.b16 %v48
    %v133 = vunpack.c.l.b16 %v49
    %v134 = vunpack.c.l.b16 %v50
    %v135 = vunpack.c.l.b16 %v51
    %v136 = vunpack.c.l.b16 %v52
    %v137 = vunpack.c.l.b16 %v53
    %v138 = vunpack.c.l.b16 %v54
    %v139 = vunpack.c.l.b16 %v55
    %v140 = vunpack.c.l.b16 %v56
    %v141 = vunpack.c.l.b16 %v57
    %v142 = vunpack.c.l.b16 %v58
    %v143 = vunpack.c.l.b16 %v59
    %v144 = vunpack.c.l.b16 %v60
    %v145 = vunpack.c.l.b16 %v61
    %v146 = vpack.c.b16 %v131, %v130
    %v147 = vpack.c.b16 %v133, %v132
    %v148 = vpack.c.b16 %v135, %v134
    %v149 = vpack.c.b16 %v137, %v136
    %v150 = vpack.c.b16 %v139, %v138
    %v151 = vpack.c.b16 %v141, %v140
    %v152 = vpack.c.b16 %v143, %v142
    %v153 = vpack.c.b16 %v145, %v144
    %162 = vmatprep.subr.bf16.mxu0 0
    %163 = vmatpush1.bf16.msra.mxu0 %v146
    %164 = vmatprep.subr.bf16.mxu0 0
    %165 = vmatpush1.bf16.msra.mxu0 %v147
    %166 = vmatprep.subr.bf16.mxu0 0
    %167 = vmatpush1.bf16.msra.mxu0 %v148
    %168 = vmatprep.subr.bf16.mxu0 0
    %169 = vmatpush1.bf16.msra.mxu0 %v149
    %170 = vmatprep.subr.bf16.mxu0 0
    %171 = vmatpush1.bf16.msra.mxu0 %v150
    %172 = vmatprep.subr.bf16.mxu0 0
    %173 = vmatpush1.bf16.msra.mxu0 %v151
    %174 = vmatprep.subr.bf16.mxu0 0
    %175 = vmatpush1.bf16.msra.mxu0 %v152
    %176 = vmatprep.subr.bf16.mxu0 0
    %177 = vmatpush1.bf16.msra.mxu0 %v153
    %178 = vmatprep.subr.bf16.mxu0 0
    %179 = vmatpush1.bf16.msra.mxu0 0
    %180 = vmatprep.subr.bf16.mxu0 0
    %181 = vmatpush1.bf16.msra.mxu0 0
    %182 = vmatprep.subr.bf16.mxu0 0
    %183 = vmatpush1.bf16.msra.mxu0 0
    %184 = vmatprep.subr.bf16.mxu0 0
    %185 = vmatpush1.bf16.msra.mxu0 0
    %186 = vmatprep.subr.bf16.mxu0 0
    %187 = vmatpush1.bf16.msra.mxu0 0
    %188 = vmatprep.subr.bf16.mxu0 0
    %189 = vmatpush1.bf16.msra.mxu0 0
    %190 = vmatprep.subr.bf16.mxu0 0
    %191 = vmatpush1.bf16.msra.mxu0 0
    %192 = vmatprep.subr.bf16.mxu0 0
    %193 = vmatpush1.bf16.msra.mxu0 0
    %194 = vmatprep.mubr.bf16.mxu0 0
    %195 = vmatmul.mubr.bf16.gmra.mrb[0].mxu0 %v98
    %v196 = vpop.f32.mrb[0].mxu0
    %v197 = vadd.f32 %v65, %v196
    %v198 = vpop.f32.mrb[0].mxu0
    %v199 = vpop.f32.mrb[0].mxu0
    %v200 = vadd.f32 %v65, %v199
    %v201 = vpop.f32.mrb[0].mxu0
    %202 = vmatprep.mubr.bf16.mxu0 0
    %203 = vmatmul.mubr.bf16.gmra.mrb[0].mxu0 %v99
    %v204 = vpop.f32.mrb[0].mxu0
    %v205 = vadd.f32 %v65, %v204
    %v206 = vpop.f32.mrb[0].mxu0
    %v207 = vpop.f32.mrb[0].mxu0
    %v208 = vadd.f32 %v65, %v207
    %v209 = vpop.f32.mrb[0].mxu0
    %210 = vmatprep.mubr.bf16.mxu0 0
    %211 = vmatmul.mubr.bf16.gmra.mrb[0].mxu0 %v100
    %v212 = vpop.f32.mrb[0].mxu0
    %v213 = vadd.f32 %v65, %v212
    %v214 = vpop.f32.mrb[0].mxu0
    %v215 = vpop.f32.mrb[0].mxu0
    %v216 = vadd.f32 %v65, %v215
    %v217 = vpop.f32.mrb[0].mxu0
    %218 = vmatprep.mubr.bf16.mxu0 0
    %219 = vmatmul.mubr.bf16.gmra.mrb[0].mxu0 %v101
    %v220 = vpop.f32.mrb[0].mxu0
    %v221 = vadd.f32 %v65, %v220
    %v222 = vpop.f32.mrb[0].mxu0
    %v223 = vpop.f32.mrb[0].mxu0
    %v224 = vadd.f32 %v65, %v223
    %v225 = vpop.f32.mrb[0].mxu0
    %226 = vmatprep.mubr.bf16.mxu0 0
    %227 = vmatmul.mubr.bf16.gmra.mrb[0].mxu0 %v102
    %v228 = vpop.f32.mrb[0].mxu0
    %v229 = vadd.f32 %v65, %v228
    %v230 = vpop.f32.mrb[0].mxu0
    %v231 = vpop.f32.mrb[0].mxu0
    %v232 = vadd.f32 %v65, %v231
    %v233 = vpop.f32.mrb[0].mxu0
    %234 = vmatprep.mubr.bf16.mxu0 0
    %235 = vmatmul.mubr.bf16.gmra.mrb[0].mxu0 %v103
    %v236 = vpop.f32.mrb[0].mxu0
    %v237 = vadd.f32 %v65, %v236
    %v238 = vpop.f32.mrb[0].mxu0
    %v239 = vpop.f32.mrb[0].mxu0
    %v240 = vadd.f32 %v65, %v239
    %v241 = vpop.f32.mrb[0].mxu0
    %242 = vmatprep.mubr.bf16.mxu0 0
    %243 = vmatmul.mubr.bf16.gmra.mrb[0].mxu0 %v104
    %v244 = vpop.f32.mrb[0].mxu0
    %v245 = vadd.f32 %v65, %v244
    %v246 = vpop.f32.mrb[0].mxu0
    %v247 = vpop.f32.mrb[0].mxu0
    %v248 = vadd.f32 %v65, %v247
    %v249 = vpop.f32.mrb[0].mxu0
    %250 = vmatprep.mubr.bf16.mxu0 0
    %251 = vmatmul.mubr.bf16.gmra.mrb[0].mxu0 %v105
    %v252 = vpop.f32.mrb[0].mxu0
    %v253 = vadd.f32 %v65, %v252
    %v254 = vpop.f32.mrb[0].mxu0
    %v255 = vpop.f32.mrb[0].mxu0
    %v256 = vadd.f32 %v65, %v255
    %v257 = vpop.f32.mrb[0].mxu0
    %258 = vdwg.mxu0
    %v259 = vmax.f32 %v197, 0.0
    %v260 = vmax.f32 %v200, 0.0
    %v261 = vmax.f32 %v205, 0.0
    %v262 = vmax.f32 %v208, 0.0
    %v263 = vmax.f32 %v213, 0.0
    %v264 = vmax.f32 %v216, 0.0
    %v265 = vmax.f32 %v221, 0.0
    %v266 = vmax.f32 %v224, 0.0
    %v267 = vmax.f32 %v229, 0.0
    %v268 = vmax.f32 %v232, 0.0
    %v269 = vmax.f32 %v237, 0.0
    %v270 = vmax.f32 %v240, 0.0
    %v271 = vmax.f32 %v245, 0.0
    %v272 = vmax.f32 %v248, 0.0
    %v273 = vmax.f32 %v253, 0.0
    %v274 = vmax.f32 %v256, 0.0
    %v275 = vpack.c.bf16 %v260, %v259
    %v276 = vpack.c.bf16 %v262, %v261
    %v277 = vpack.c.bf16 %v264, %v263
    %v278 = vpack.c.bf16 %v266, %v265
    %v279 = vpack.c.bf16 %v268, %v267
    %v280 = vpack.c.bf16 %v270, %v269
    %v281 = vpack.c.bf16 %v272, %v271
    %v282 = vpack.c.bf16 %v274, %v273
    %s283 = scalar_lea.vmem [#allocation2], 64
    %v284 = vld [vmem:[%s283] sm:$0xf]
    %v285 = vld [vmem:[%s283 + $0x4] sm:$0xf]
    %v286 = vld [vmem:[%s283 + $0x8] sm:$0xf]
    %v287 = vld [vmem:[%s283 + $0xc] sm:$0xf]
    %v288 = vld [vmem:[%s283 + $0x10] sm:$0xf]
    %v289 = vld [vmem:[%s283 + $0x14] sm:$0xf]
    %v290 = vld [vmem:[%s283 + $0x18] sm:$0xf]
    %v291 = vld [vmem:[%s283 + $0x1c] sm:$0xf]
    %v292 = vld [vmem:[%s283 + $0x20] sm:$0xf]
    %v293 = vld [vmem:[%s283 + $0x24] sm:$0xf]
    %v294 = vld [vmem:[%s283 + $0x28] sm:$0xf]
    %v295 = vld [vmem:[%s283 + $0x2c] sm:$0xf]
    %v296 = vld [vmem:[%s283 + $0x30] sm:$0xf]
    %v297 = vld [vmem:[%s283 + $0x34] sm:$0xf]
    %v298 = vld [vmem:[%s283 + $0x38] sm:$0xf]
    %v299 = vld [vmem:[%s283 + $0x3c] sm:$0xf]
    %v300 = vlaneseq
    %v301 = vshrl.u32 %v300, 7
    %v302 = vsub.s32 1, %v301
    %v303 = vrot.slane %v29, %v302
    %v320 = vunpack.c.l.b16 %v284
    %v321 = vunpack.c.l.b16 %v285
    %v322 = vunpack.c.l.b16 %v286
    %v323 = vunpack.c.l.b16 %v287
    %v324 = vunpack.c.l.b16 %v288
    %v325 = vunpack.c.l.b16 %v289
    %v326 = vunpack.c.l.b16 %v290
    %v327 = vunpack.c.l.b16 %v291
    %v328 = vunpack.c.l.b16 %v292
    %v329 = vunpack.c.l.b16 %v293
    %v330 = vunpack.c.l.b16 %v294
    %v331 = vunpack.c.l.b16 %v295
    %v332 = vunpack.c.l.b16 %v296
    %v333 = vunpack.c.l.b16 %v297
    %v334 = vunpack.c.l.b16 %v298
    %v335 = vunpack.c.l.b16 %v299
    %v336 = vpack.c.b16 %v321, %v320
    %v337 = vpack.c.b16 %v323, %v322
    %v338 = vpack.c.b16 %v325, %v324
    %v339 = vpack.c.b16 %v327, %v326
    %v340 = vpack.c.b16 %v329, %v328
    %v341 = vpack.c.b16 %v331, %v330
    %v342 = vpack.c.b16 %v333, %v332
    %v343 = vpack.c.b16 %v335, %v334
    %352 = vmatprep.subr.bf16.mxu0 0
    %353 = vmatpush1.bf16.msra.mxu0 %v336
    %354 = vmatprep.subr.bf16.mxu0 0
    %355 = vmatpush1.bf16.msra.mxu0 %v337
    %356 = vmatprep.subr.bf16.mxu0 0
    %357 = vmatpush1.bf16.msra.mxu0 %v338
    %358 = vmatprep.subr.bf16.mxu0 0
    %359 = vmatpush1.bf16.msra.mxu0 %v339
    %360 = vmatprep.subr.bf16.mxu0 0
    %361 = vmatpush1.bf16.msra.mxu0 %v340
    %362 = vmatprep.subr.bf16.mxu0 0
    %363 = vmatpush1.bf16.msra.mxu0 %v341
    %364 = vmatprep.subr.bf16.mxu0 0
    %365 = vmatpush1.bf16.msra.mxu0 %v342
    %366 = vmatprep.subr.bf16.mxu0 0
    %367 = vmatpush1.bf16.msra.mxu0 %v343
    %368 = vmatprep.subr.bf16.mxu0 0
    %369 = vmatpush1.bf16.msra.mxu0 0
    %370 = vmatprep.subr.bf16.mxu0 0
    %371 = vmatpush1.bf16.msra.mxu0 0
    %372 = vmatprep.subr.bf16.mxu0 0
    %373 = vmatpush1.bf16.msra.mxu0 0
    %374 = vmatprep.subr.bf16.mxu0 0
    %375 = vmatpush1.bf16.msra.mxu0 0
    %376 = vmatprep.subr.bf16.mxu0 0
    %377 = vmatpush1.bf16.msra.mxu0 0
    %378 = vmatprep.subr.bf16.mxu0 0
    %379 = vmatpush1.bf16.msra.mxu0 0
    %380 = vmatprep.subr.bf16.mxu0 0
    %381 = vmatpush1.bf16.msra.mxu0 0
    %382 = vmatprep.subr.bf16.mxu0 0
    %383 = vmatpush1.bf16.msra.mxu0 0
    %384 = vmatprep.mubr.bf16.mxu0 0
    %385 = vmatmul.mubr.bf16.gmra.mrb[0].mxu0 %v275
    %v386 = vpop.f32.mrb[0].mxu0
    %v387 = vadd.f32 %v303, %v386
    %v388 = vpop.f32.mrb[0].mxu0
    %v389 = vpop.f32.mrb[0].mxu0
    %v390 = vadd.f32 %v303, %v389
    %v391 = vpop.f32.mrb[0].mxu0
    %392 = vmatprep.mubr.bf16.mxu0 0
    %393 = vmatmul.mubr.bf16.gmra.mrb[0].mxu0 %v276
    %v394 = vpop.f32.mrb[0].mxu0
    %v395 = vadd.f32 %v303, %v394
    %v396 = vpop.f32.mrb[0].mxu0
    %v397 = vpop.f32.mrb[0].mxu0
    %v398 = vadd.f32 %v303, %v397
    %v399 = vpop.f32.mrb[0].mxu0
    %400 = vmatprep.mubr.bf16.mxu0 0
    %401 = vmatmul.mubr.bf16.gmra.mrb[0].mxu0 %v277
    %v402 = vpop.f32.mrb[0].mxu0
    %v403 = vadd.f32 %v303, %v402
    %v404 = vpop.f32.mrb[0].mxu0
    %v405 = vpop.f32.mrb[0].mxu0
    %v406 = vadd.f32 %v303, %v405
    %v407 = vpop.f32.mrb[0].mxu0
    %408 = vmatprep.mubr.bf16.mxu0 0
    %409 = vmatmul.mubr.bf16.gmra.mrb[0].mxu0 %v278
    %v410 = vpop.f32.mrb[0].mxu0
    %v411 = vadd.f32 %v303, %v410
    %v412 = vpop.f32.mrb[0].mxu0
    %v413 = vpop.f32.mrb[0].mxu0
    %v414 = vadd.f32 %v303, %v413
    %v415 = vpop.f32.mrb[0].mxu0
    %416 = vmatprep.mubr.bf16.mxu0 0
    %417 = vmatmul.mubr.bf16.gmra.mrb[0].mxu0 %v279
    %v418 = vpop.f32.mrb[0].mxu0
    %v419 = vadd.f32 %v303, %v418
    %v420 = vpop.f32.mrb[0].mxu0
    %v421 = vpop.f32.mrb[0].mxu0
    %v422 = vadd.f32 %v303, %v421
    %v423 = vpop.f32.mrb[0].mxu0
    %424 = vmatprep.mubr.bf16.mxu0 0
    %425 = vmatmul.mubr.bf16.gmra.mrb[0].mxu0 %v280
    %v426 = vpop.f32.mrb[0].mxu0
    %v427 = vadd.f32 %v303, %v426
    %v428 = vpop.f32.mrb[0].mxu0
    %v429 = vpop.f32.mrb[0].mxu0
    %v430 = vadd.f32 %v303, %v429
    %v431 = vpop.f32.mrb[0].mxu0
    %432 = vmatprep.mubr.bf16.mxu0 0
    %433 = vmatmul.mubr.bf16.gmra.mrb[0].mxu0 %v281
    %v434 = vpop.f32.mrb[0].mxu0
    %v435 = vadd.f32 %v303, %v434
    %v436 = vpop.f32.mrb[0].mxu0
    %v437 = vpop.f32.mrb[0].mxu0
    %v438 = vadd.f32 %v303, %v437
    %v439 = vpop.f32.mrb[0].mxu0
    %440 = vmatprep.mubr.bf16.mxu0 0
    %441 = vmatmul.mubr.bf16.gmra.mrb[0].mxu0 %v282
    %v442 = vpop.f32.mrb[0].mxu0
    %v443 = vadd.f32 %v303, %v442
    %v444 = vpop.f32.mrb[0].mxu0
    %v445 = vpop.f32.mrb[0].mxu0
    %v446 = vadd.f32 %v303, %v445
    %v447 = vpop.f32.mrb[0].mxu0
    %448 = vdwg.mxu0
    %v449 = vmax.f32 %v387, 0.0
    %v450 = vmax.f32 %v390, 0.0
    %v451 = vmax.f32 %v395, 0.0
    %v452 = vmax.f32 %v398, 0.0
    %v453 = vmax.f32 %v403, 0.0
    %v454 = vmax.f32 %v406, 0.0
    %v455 = vmax.f32 %v411, 0.0
    %v456 = vmax.f32 %v414, 0.0
    %v457 = vmax.f32 %v419, 0.0
    %v458 = vmax.f32 %v422, 0.0
    %v459 = vmax.f32 %v427, 0.0
    %v460 = vmax.f32 %v430, 0.0
    %v461 = vmax.f32 %v435, 0.0
    %v462 = vmax.f32 %v438, 0.0
    %v463 = vmax.f32 %v443, 0.0
    %v464 = vmax.f32 %v446, 0.0
    %v465 = vpack.c.bf16 %v450, %v449
    %v466 = vpack.c.bf16 %v452, %v451
    %v467 = vpack.c.bf16 %v454, %v453
    %v468 = vpack.c.bf16 %v456, %v455
    %v469 = vpack.c.bf16 %v458, %v457
    %v470 = vpack.c.bf16 %v460, %v459
    %v471 = vpack.c.bf16 %v462, %v461
    %v472 = vpack.c.bf16 %v464, %v463
    %s473 = scalar_lea.vmem [#allocation2], 128
    %v474 = vld [vmem:[%s473] sm:$0xf]
    %v475 = vld [vmem:[%s473 + $0x4] sm:$0xf]
    %v476 = vld [vmem:[%s473 + $0x8] sm:$0xf]
    %v477 = vld [vmem:[%s473 + $0xc] sm:$0xf]
    %v478 = vld [vmem:[%s473 + $0x10] sm:$0xf]
    %v479 = vld [vmem:[%s473 + $0x14] sm:$0xf]
    %v480 = vld [vmem:[%s473 + $0x18] sm:$0xf]
    %v481 = vld [vmem:[%s473 + $0x1c] sm:$0xf]
    %v482 = vld [vmem:[%s473 + $0x20] sm:$0xf]
    %v483 = vld [vmem:[%s473 + $0x24] sm:$0xf]
    %v484 = vld [vmem:[%s473 + $0x28] sm:$0xf]
    %v485 = vld [vmem:[%s473 + $0x2c] sm:$0xf]
    %v486 = vld [vmem:[%s473 + $0x30] sm:$0xf]
    %v487 = vld [vmem:[%s473 + $0x34] sm:$0xf]
    %v488 = vld [vmem:[%s473 + $0x38] sm:$0xf]
    %v489 = vld [vmem:[%s473 + $0x3c] sm:$0xf]
    %v490 = vlaneseq
    %v491 = vshrl.u32 %v490, 7
    %v492 = vsub.s32 2, %v491
    %v493 = vrot.slane %v29, %v492
    %v510 = vunpack.c.l.b16 %v474
    %v511 = vunpack.c.l.b16 %v475
    %v512 = vunpack.c.l.b16 %v476
    %v513 = vunpack.c.l.b16 %v477
    %v514 = vunpack.c.l.b16 %v478
    %v515 = vunpack.c.l.b16 %v479
    %v516 = vunpack.c.l.b16 %v480
    %v517 = vunpack.c.l.b16 %v481
    %v518 = vunpack.c.l.b16 %v482
    %v519 = vunpack.c.l.b16 %v483
    %v520 = vunpack.c.l.b16 %v484
    %v521 = vunpack.c.l.b16 %v485
    %v522 = vunpack.c.l.b16 %v486
    %v523 = vunpack.c.l.b16 %v487
    %v524 = vunpack.c.l.b16 %v488
    %v525 = vunpack.c.l.b16 %v489
    %v526 = vpack.c.b16 %v511, %v510
    %v527 = vpack.c.b16 %v513, %v512
    %v528 = vpack.c.b16 %v515, %v514
    %v529 = vpack.c.b16 %v517, %v516
    %v530 = vpack.c.b16 %v519, %v518
    %v531 = vpack.c.b16 %v521, %v520
    %v532 = vpack.c.b16 %v523, %v522
    %v533 = vpack.c.b16 %v525, %v524
    %542 = vmatprep.subr.bf16.mxu0 0
    %543 = vmatpush1.bf16.msra.mxu0 %v526
    %544 = vmatprep.subr.bf16.mxu0 0
    %545 = vmatpush1.bf16.msra.mxu0 %v527
    %546 = vmatprep.subr.bf16.mxu0 0
    %547 = vmatpush1.bf16.msra.mxu0 %v528
    %548 = vmatprep.subr.bf16.mxu0 0
    %549 = vmatpush1.bf16.msra.mxu0 %v529
    %550 = vmatprep.subr.bf16.mxu0 0
    %551 = vmatpush1.bf16.msra.mxu0 %v530
    %552 = vmatprep.subr.bf16.mxu0 0
    %553 = vmatpush1.bf16.msra.mxu0 %v531
    %554 = vmatprep.subr.bf16.mxu0 0
    %555 = vmatpush1.bf16.msra.mxu0 %v532
    %556 = vmatprep.subr.bf16.mxu0 0
    %557 = vmatpush1.bf16.msra.mxu0 %v533
    %558 = vmatprep.subr.bf16.mxu0 0
    %559 = vmatpush1.bf16.msra.mxu0 0
    %560 = vmatprep.subr.bf16.mxu0 0
    %561 = vmatpush1.bf16.msra.mxu0 0
    %562 = vmatprep.subr.bf16.mxu0 0
    %563 = vmatpush1.bf16.msra.mxu0 0
    %564 = vmatprep.subr.bf16.mxu0 0
    %565 = vmatpush1.bf16.msra.mxu0 0
    %566 = vmatprep.subr.bf16.mxu0 0
    %567 = vmatpush1.bf16.msra.mxu0 0
    %568 = vmatprep.subr.bf16.mxu0 0
    %569 = vmatpush1.bf16.msra.mxu0 0
    %570 = vmatprep.subr.bf16.mxu0 0
    %571 = vmatpush1.bf16.msra.mxu0 0
    %572 = vmatprep.subr.bf16.mxu0 0
    %573 = vmatpush1.bf16.msra.mxu0 0
    %574 = vmatprep.mubr.bf16.mxu0 0
    %575 = vmatmul.mubr.bf16.gmra.mrb[0].mxu0 %v465
    %v576 = vpop.f32.mrb[0].mxu0
    %v577 = vadd.f32 %v493, %v576
    %v578 = vpop.f32.mrb[0].mxu0
    %v579 = vpop.f32.mrb[0].mxu0
    %v580 = vadd.f32 %v493, %v579
    %v581 = vpop.f32.mrb[0].mxu0
    %582 = vmatprep.mubr.bf16.mxu0 0
    %583 = vmatmul.mubr.bf16.gmra.mrb[0].mxu0 %v466
    %v584 = vpop.f32.mrb[0].mxu0
    %v585 = vadd.f32 %v493, %v584
    %v586 = vpop.f32.mrb[0].mxu0
    %v587 = vpop.f32.mrb[0].mxu0
    %v588 = vadd.f32 %v493, %v587
    %v589 = vpop.f32.mrb[0].mxu0
    %590 = vmatprep.mubr.bf16.mxu0 0
    %591 = vmatmul.mubr.bf16.gmra.mrb[0].mxu0 %v467
    %v592 = vpop.f32.mrb[0].mxu0
    %v593 = vadd.f32 %v493, %v592
    %v594 = vpop.f32.mrb[0].mxu0
    %v595 = vpop.f32.mrb[0].mxu0
    %v596 = vadd.f32 %v493, %v595
    %v597 = vpop.f32.mrb[0].mxu0
    %598 = vmatprep.mubr.bf16.mxu0 0
    %599 = vmatmul.mubr.bf16.gmra.mrb[0].mxu0 %v468
    %v600 = vpop.f32.mrb[0].mxu0
    %v601 = vadd.f32 %v493, %v600
    %v602 = vpop.f32.mrb[0].mxu0
    %v603 = vpop.f32.mrb[0].mxu0
    %v604 = vadd.f32 %v493, %v603
    %v605 = vpop.f32.mrb[0].mxu0
    %606 = vmatprep.mubr.bf16.mxu0 0
    %607 = vmatmul.mubr.bf16.gmra.mrb[0].mxu0 %v469
    %v608 = vpop.f32.mrb[0].mxu0
    %v609 = vadd.f32 %v493, %v608
    %v610 = vpop.f32.mrb[0].mxu0
    %v611 = vpop.f32.mrb[0].mxu0
    %v612 = vadd.f32 %v493, %v611
    %v613 = vpop.f32.mrb[0].mxu0
    %614 = vmatprep.mubr.bf16.mxu0 0
    %615 = vmatmul.mubr.bf16.gmra.mrb[0].mxu0 %v470
    %v616 = vpop.f32.mrb[0].mxu0
    %v617 = vadd.f32 %v493, %v616
    %v618 = vpop.f32.mrb[0].mxu0
    %v619 = vpop.f32.mrb[0].mxu0
    %v620 = vadd.f32 %v493, %v619
    %v621 = vpop.f32.mrb[0].mxu0
    %622 = vmatprep.mubr.bf16.mxu0 0
    %623 = vmatmul.mubr.bf16.gmra.mrb[0].mxu0 %v471
    %v624 = vpop.f32.mrb[0].mxu0
    %v625 = vadd.f32 %v493, %v624
    %v626 = vpop.f32.mrb[0].mxu0
    %v627 = vpop.f32.mrb[0].mxu0
    %v628 = vadd.f32 %v493, %v627
    %v629 = vpop.f32.mrb[0].mxu0
    %630 = vmatprep.mubr.bf16.mxu0 0
    %631 = vmatmul.mubr.bf16.gmra.mrb[0].mxu0 %v472
    %v632 = vpop.f32.mrb[0].mxu0
    %v633 = vadd.f32 %v493, %v632
    %v634 = vpop.f32.mrb[0].mxu0
    %v635 = vpop.f32.mrb[0].mxu0
    %v636 = vadd.f32 %v493, %v635
    %v637 = vpop.f32.mrb[0].mxu0
    %638 = vdwg.mxu0
    %639 = vst [vmem:[%s3] sm:$0xff] %v577
    %640 = vst [vmem:[%s3 + $0x8] sm:$0xff] %v580
    %641 = vst [vmem:[%s3 + $0x10] sm:$0xff] %v585
    %642 = vst [vmem:[%s3 + $0x18] sm:$0xff] %v588
    %643 = vst [vmem:[%s3 + $0x20] sm:$0xff] %v593
    %644 = vst [vmem:[%s3 + $0x28] sm:$0xff] %v596
    %645 = vst [vmem:[%s3 + $0x30] sm:$0xff] %v601
    %646 = vst [vmem:[%s3 + $0x38] sm:$0xff] %v604
    %647 = vst [vmem:[%s3 + $0x40] sm:$0xff] %v609
    %648 = vst [vmem:[%s3 + $0x48] sm:$0xff] %v612
    %649 = vst [vmem:[%s3 + $0x50] sm:$0xff] %v617
    %650 = vst [vmem:[%s3 + $0x58] sm:$0xff] %v620
    %651 = vst [vmem:[%s3 + $0x60] sm:$0xff] %v625
    %652 = vst [vmem:[%s3 + $0x68] sm:$0xff] %v628
    %653 = vst [vmem:[%s3 + $0x70] sm:$0xff] %v633
    %654 = vst [vmem:[%s3 + $0x78] sm:$0xff] %v636
    // Predicated region
    $region18: #{mlp_forward.1} parent=1 // pred_check
      _
    $region19: #{mlp_forward.1} parent=1 // pred_check_branch
      %656 = sbr.rel (0) target = $region21
    $region20: #{mlp_forward.1} parent=1 // pred_region
      _
    $region21: #{mlp_forward.1} parent=1 // pred_fallthru
      _
    // Predicated region
    $region22: #{mlp_forward.1} parent=1 // pred_check
      _
    $region23: #{mlp_forward.1} parent=1 // pred_check_branch
      %658 = sbr.rel (0) target = $region25
    $region24: #{mlp_forward.1} parent=1 // pred_region
      _
    $region25: #{mlp_forward.1} parent=1 // pred_fallthru
      _
    %659 = vsyncpa [#allocation3], 1

</llo_original>
